<compile_context>
chip_gen: v5e
topology: v5e:2x2
jax: 0.10.0
libtpu: 0.0.40
codegen_flags: <defaults>
</compile_context>

<pallas_src>
import math

import jax
import jax.numpy as jnp
from jax.experimental import pallas as pl
from jax.experimental.pallas import tpu as pltpu

_LANE = 128
_SUBLANE = 8
# ~2 MiB per buffer.  BlockSpec double-buffers input and output, so the
# resident VMEM cost is ~4 * 2 MiB = 8 MiB: safe on v5e (16 MiB scoped
# default), v6e (32 MiB) and v7x (32-of-64 MiB) without touching
# vmem_limit_bytes.
_TARGET_TILE_BYTES = 2 * 1024 * 1024


def _identity_kernel(x_ref, o_ref):
    # forward(x) = x : straight pass-through of the VMEM tile.
    o_ref[...] = x_ref[...]


def _lane_dense_2d(shape):
    """Factor the flat element count into (rows, cols) with cols a large
    multiple of 128 when possible (unmasked full-width stores, contiguous
    DMAs).  Falls back to the original trailing dim for ragged sizes."""
    total = int(math.prod(shape)) if len(shape) > 0 else 1
    for cols in (4096, 2048, 1024, 512, 256, 128):
        if total % cols == 0:
            return total // cols, cols
    if len(shape) >= 2 and shape[-1] > 0:
        return total // shape[-1], shape[-1]
    return 1, total


def _pick_tile_rows(rows, row_bytes):
    """Byte-targeted, sublane-aligned tile height."""
    if rows <= _SUBLANE:
        # Tiny row count: full-extent block (allowed even if not 8-aligned).
        return rows
    # Rows per ~2 MiB tile, rounded down to a multiple of 8.
    tr = max(_SUBLANE,
             (_TARGET_TILE_BYTES // max(row_bytes, 1)) // _SUBLANE * _SUBLANE)
    # Prefer >= 2 grid steps so the parallel grid axis can shard across
    # v7x's two TensorCores (neutral on v5e/v6e).
    half = (pl.cdiv(rows, 2) // _SUBLANE) * _SUBLANE
    if half >= _SUBLANE:
        tr = min(tr, half)
    # Never exceed the (sublane-aligned) row count; pl.cdiv on the grid
    # handles the ragged last block instead of collapsing to one giant tile.
    return min(tr, (rows // _SUBLANE) * _SUBLANE)


def input_layer_forward(x: jax.Array) -> jax.Array:
    """Identity forward pass of InputLayer via a bandwidth-tuned Pallas copy."""
    if x.size == 0:
        return x

    orig_shape = x.shape
    rows, cols = _lane_dense_2d(orig_shape)
    x2 = x.reshape(rows, cols)

    tile_rows = _pick_tile_rows(rows, cols * jnp.dtype(x.dtype).itemsize)
    grid = (pl.cdiv(rows, tile_rows),)

    out2 = pl.pallas_call(
        _identity_kernel,
        out_shape=jax.ShapeDtypeStruct((rows, cols), x.dtype),
        grid=grid,
        in_specs=[pl.BlockSpec((tile_rows, cols), lambda i: (i, 0))],
        out_specs=pl.BlockSpec((tile_rows, cols), lambda i: (i, 0)),
        compiler_params=pltpu.CompilerParams(
            dimension_semantics=("parallel",),
        ),
    )(x2)

    return out2.reshape(orig_shape)


if __name__ == "__main__":
    # InputLayer has no parameters; only the example input is needed.
    key = jax.random.PRNGKey(0)
    k0, k1 = jax.random.split(key)

    # Primary check: NCHW input like the PyTorch module would receive.
    x = jax.random.normal(k0, (2, 4, 16, 16), dtype=jnp.float32)
    y = jax.block_until_ready(input_layer_forward(x))
    assert y.shape == x.shape and y.dtype == x.dtype
    assert bool(jnp.array_equal(y, x)), "identity forward mismatch (NCHW)"

    # Secondary check: a shape that exercises the lane-dense multi-step grid
    # (rows > tile_rows -> grid of 2 pipelined/parallel steps).
    x_big = jax.random.normal(k1, (64, 2048), dtype=jnp.float32)
    y_big = jax.block_until_ready(input_layer_forward(x_big))
    assert y_big.shape == x_big.shape and y_big.dtype == x_big.dtype
    assert bool(jnp.array_equal(y_big, x_big)), "identity forward mismatch (2D)"

    print("KERNEL_OK")
</pallas_src>

<mosaic_0001>
module attributes {stable_mosaic.version = 11 : i64} {
  func.func @_identity_kernel(%arg0: i32, %arg1: memref<1x2048xf32, #tpu.memory_space<vmem>>, %arg2: memref<1x2048xf32, #tpu.memory_space<vmem>>) attributes {dimension_semantics = [#tpu.dimension_semantics<parallel>], iteration_bounds = array<i64: 1>, scalar_prefetch = 0 : i64, scratch_operands = 0 : i64, tpu.core_type = #tpu.core_type<tc>, window_params = [{transform_indices = @transform_0, window_bounds = array<i64: 1, 2048>}, {transform_indices = @transform_1, window_bounds = array<i64: 1, 2048>}]} {
    %c0 = arith.constant 0 : index
    %c0_0 = arith.constant 0 : index
    %0 = vector.load %arg1[%c0, %c0_0] : memref<1x2048xf32, #tpu.memory_space<vmem>>, vector<1x2048xf32>
    %c0_1 = arith.constant 0 : index
    %c0_2 = arith.constant 0 : index
    %1 = vector.load %arg2[%c0_1, %c0_2] : memref<1x2048xf32, #tpu.memory_space<vmem>>, vector<1x2048xf32>
    tpu.vector_store %arg2[%c0_1, %c0_2], %0 {strides = array<i32>} : memref<1x2048xf32, #tpu.memory_space<vmem>>, vector<1x2048xf32>,
    return
  }
  func.func @transform_0(%arg0: i32) -> (i32, i32) {
    %c0_i32 = arith.constant 0 : i32
    %c0_i32_0 = arith.constant 0 : i32
    return %arg0, %c0_i32 : i32, i32
  }
  func.func @transform_1(%arg0: i32) -> (i32, i32) {
    %c0_i32 = arith.constant 0 : i32
    %c0_i32_0 = arith.constant 0 : i32
    return %arg0, %c0_i32 : i32, i32
  }
}

</mosaic_0001>

<llo_original>
// kernel: tpu_custom_call.1
$region0: #{tpu_custom_call.1}
  #allocation0 [shape = 'u32[]', space=smem, size = 0x4, offset = 0x4, fixed_abs, tag = 'smem constant byte address 0x4 - core index']
  #allocation1 [shape = 'u32[72,128]{1,0:T(1,128)}', space=vmem, size = 0x9000, scoped, tag = 'internal scratch']
  %s0 = inlined_call_operand.hbm [shape: f32[1,2048], index: 0, kind: input, shape index: {}]
  %s1 = inlined_call_operand.hbm [shape: f32[1,2048], index: 1, kind: output, shape index: {}]
  %s2 = sld [smem:[#allocation0]]
  $region18: #{tpu_custom_call.1} parent=0
    _
  %s4 = ssub.s32 1, %s2
  %s5 = scalar_select 0, %s4, %s2
  $region1: #{tpu_custom_call.1} parent=0
    #allocation2 [shape = 'u8[8192]{0}', space=vmem, size = 0x2000, scoped, tag = 'input window, operand 0, single buffered']
    #allocation3 [shape = 's32[1]{0}', space=sflag, size = 0x4, scoped, tag = 'scoped memory for tpu_custom_call.1']
    #allocation4 [shape = 's32[1]{0}', space=sflag, size = 0x4, scoped, tag = 'scoped memory for tpu_custom_call.1']
    #allocation5 [shape = 'u8[8192]{0}', space=vmem, size = 0x2000, scoped, tag = 'output window, operand 0, single buffered']
    %6 = vsyncpa [#allocation3], 0
    %7 = vsyncpa [#allocation4], 0
    // Predicated region
    $region2: #{tpu_custom_call.1} parent=1 // pred_check
      _
    $region3: #{tpu_custom_call.1} parent=1 // pred_check_branch
      %9 = sbr.rel (0) target = $region5
    $region4: #{tpu_custom_call.1} parent=1 // pred_region
      %11 = vsyncadd [#allocation3], 0
      %s13 = sshll.u32 %s0, 4
      %s14 = int_to_ptr.hbm [resolvable:$true] %s13
      %s15 = sshll.u32 [#allocation2], 4
      %s16 = int_to_ptr.vmem [resolvable:$true] %s15
      %18 = dma.hbm_to_vmem [thread:$0]  %s14, 256, %s16, [#allocation3]
    $region5: #{tpu_custom_call.1} parent=1 // pred_fallthru
      _
    // Predicated region
    $region6: #{tpu_custom_call.1} parent=1 // pred_check
      _
    $region7: #{tpu_custom_call.1} parent=1 // pred_check_branch
      %20 = sbr.rel (0) target = $region9
    $region8: #{tpu_custom_call.1} parent=1 // pred_region
      %22 = dma.done [#allocation3], 256
    $region9: #{tpu_custom_call.1} parent=1 // pred_fallthru
      _
    %v23 = vld [vmem:[#allocation2] sm:$0xff]
    %v24 = vld [vmem:[#allocation2 + $0x8] sm:$0xff]
    %25 = vst [vmem:[#allocation5] sm:$0xff] %v23
    %26 = vst [vmem:[#allocation5 + $0x8] sm:$0xff] %v24
    // Predicated region
    $region10: #{tpu_custom_call.1} parent=1 // pred_check
      _
    $region11: #{tpu_custom_call.1} parent=1 // pred_check_branch
      %28 = sbr.rel (0) target = $region13
    $region12: #{tpu_custom_call.1} parent=1 // pred_region
      %30 = vsyncadd [#allocation4], 0
      %s32 = sshll.u32 [#allocation5], 4
      %s33 = int_to_ptr.vmem [resolvable:$true] %s32
      %s34 = sshll.u32 %s1, 4
      %s35 = int_to_ptr.hbm [resolvable:$true] %s34
      %37 = dma.vmem_to_hbm [thread:$0]  %s33, 256, %s35, [#allocation4]
    $region13: #{tpu_custom_call.1} parent=1 // pred_fallthru
      _
    // Predicated region
    $region14: #{tpu_custom_call.1} parent=1 // pred_check
      _
    $region15: #{tpu_custom_call.1} parent=1 // pred_check_branch
      %39 = sbr.rel (0) target = $region17
    $region16: #{tpu_custom_call.1} parent=1 // pred_region
      %41 = dma.done [#allocation4], 256
    $region17: #{tpu_custom_call.1} parent=1 // pred_fallthru
      _
    %42 = vsyncpa [#allocation3], 1
    %43 = vsyncpa [#allocation4], 1

</llo_original>
